<compile_context>
chip_gen: v5e
topology: v5e:2x2
jax: 0.10.0
libtpu: 0.0.40
codegen_flags: <defaults>
</compile_context>

<pallas_src>
import jax
import jax.numpy as jnp
from jax.experimental import pallas as pl
from jax.experimental.pallas import tpu as pltpu

INPUT_SIZE = 57
HIDDEN_SIZE = 32
NUM_CLASSES = 1
FC1_SIZE = 128
NUM_LAYERS = 1  # single-layer LSTM (matches num_layers=1)

# ---------------- packed-weight layout (rows of a (TOTAL_ROWS, 128) buffer) --
LANES = 128
IP = ((INPUT_SIZE + 7) // 8) * 8          # input dim zero-padded to 64
G4 = 4 * HIDDEN_SIZE                      # 128 gate lanes


def _align8(n):
    return ((n + 7) // 8) * 8


ROW_WIH = 0                                # (IP, 4H)   pre-scaled
ROW_WHH = _align8(ROW_WIH + IP)            # (H, 4H)    pre-scaled
ROW_B = _align8(ROW_WHH + HIDDEN_SIZE)     # (1, 4H)    b_ih + b_hh, pre-scaled
ROW_W1 = ROW_B + 8                         # (H, 128)
ROW_B1 = _align8(ROW_W1 + HIDDEN_SIZE)     # (1, 128)
ROW_W2 = ROW_B1 + 8                        # (128, 128) zero-padded cols
ROW_B2 = _align8(ROW_W2 + FC1_SIZE)        # (1, 128)   zero-padded lanes
ROW_POST = ROW_B2 + 8                      # post_a (row), post_b (row+1)
TOTAL_ROWS = ROW_POST + 8                  # 288 rows -> 144 KiB VMEM


def lstm_mlp_kernel(x_ref, w_ref, out_ref):
    # x_ref:  (T*Bp, IP)        time-major, batch/contraction padded input
    # w_ref:  (TOTAL_ROWS, 128) packed weights (see layout above)
    # out_ref:(Bp, 128)         lane-dense output; real logit is lane 0
    B = out_ref.shape[0]
    T = x_ref.shape[0] // B
    H = HIDDEN_SIZE

    # ---- one-time, loop-invariant loads from the packed buffer ----
    wih = w_ref[ROW_WIH:ROW_WIH + IP, :]                    # (IP, 4H)
    whh = w_ref[ROW_WHH:ROW_WHH + H, :]                     # (H, 4H)
    b = w_ref[ROW_B:ROW_B + 1, :]                           # (1, 4H)
    w1 = w_ref[ROW_W1:ROW_W1 + H, :]                        # (H, 128)
    b1 = w_ref[ROW_B1:ROW_B1 + 1, :]                        # (1, 128)
    w2 = w_ref[ROW_W2:ROW_W2 + FC1_SIZE, :]                 # (128, 128)
    b2 = w_ref[ROW_B2:ROW_B2 + 1, :]                        # (1, 128)
    post_a = w_ref[ROW_POST:ROW_POST + 1, :]                # (1, 4H)
    post_b = w_ref[ROW_POST + 1:ROW_POST + 2, :]            # (1, 4H)

    # ---- hoisted input projection, off the serial recurrence chain:
    #      (T*Bp, IP) @ (IP, 4H) -> (T*Bp, 4H) ----
    g_all = (jnp.dot(x_ref[...], wih, preferred_element_type=jnp.float32)
             + b)                                           # (T*Bp, 4H)

    h = jnp.zeros((B, H), jnp.float32)
    c = jnp.zeros((B, H), jnp.float32)

    # ---- fully-unrolled recurrence (T static & small). Per step: one
    #      (Bp,H)@(H,4H) MXU matmul + ONE whole-vreg tanh (EUP) + VPU ops;
    #      sigmoid on the i/f/o lanes is reconstructed as 0.5*y + 0.5
    #      (the 0.5 input pre-scale is already folded into wih/whh/b). ----
    for t in range(T):
        gates = g_all[t * B:(t + 1) * B, :] + jnp.dot(
            h, whh, preferred_element_type=jnp.float32)     # (Bp, 4H)
        y = jnp.tanh(gates)                                  # 1 EUP push
        act = y * post_a + post_b                            # VPU lane fixup
        # PyTorch gate order: i, f, g, o
        i_g = act[:, 0:H]
        f_g = act[:, H:2 * H]
        g_g = act[:, 2 * H:3 * H]
        o_g = act[:, 3 * H:4 * H]
        c = f_g * c + i_g * g_g
        h = o_g * jnp.tanh(c)

    # dropout is identity in eval mode; ReLU -> fc_1 -> ReLU -> fc
    hidden = jnp.maximum(h, 0.0)
    z = jnp.maximum(
        jnp.dot(hidden, w1, preferred_element_type=jnp.float32) + b1, 0.0)
    # fc output padded to 128 lanes (zero cols beyond NUM_CLASSES) so the
    # final store is an unmasked, lane-dense vst.
    out_ref[...] = (jnp.dot(z, w2, preferred_element_type=jnp.float32) + b2)


def prepare_params(params):
    """One-time packing of all weights/biases into a single (288,128) buffer.

    Folds b_ih+b_hh, transposes all matrices, zero-pads the input-contraction
    dim and the fc output dim, and pre-scales the sigmoid gate columns by 0.5
    so the kernel needs only one tanh per step.
    """
    w_ih, w_hh, b_ih, b_hh, w1, b1, w2, b2 = params
    H = HIDDEN_SIZE

    # sigmoid lanes (i, f, o) get the 0.5 pre-scale; tanh lanes (g) get 1.0
    scale = jnp.concatenate([jnp.full((2 * H,), 0.5, jnp.float32),
                             jnp.ones((H,), jnp.float32),
                             jnp.full((H,), 0.5, jnp.float32)])
    post_a = scale                                            # 0.5 / 1.0 / 0.5
    post_b = jnp.concatenate([jnp.full((2 * H,), 0.5, jnp.float32),
                              jnp.zeros((H,), jnp.float32),
                              jnp.full((H,), 0.5, jnp.float32)])

    wih_t = jnp.pad(w_ih.T, ((0, IP - INPUT_SIZE), (0, 0))) * scale[None, :]
    whh_t = w_hh.T * scale[None, :]
    b = ((b_ih + b_hh) * scale).reshape(1, G4)
    w1_t = w1.T                                               # (H, 128)
    b1_r = b1.reshape(1, FC1_SIZE)
    w2_t = jnp.pad(w2.T, ((0, 0), (0, LANES - NUM_CLASSES)))  # (128, 128)
    b2_r = jnp.pad(b2.reshape(1, NUM_CLASSES),
                   ((0, 0), (0, LANES - NUM_CLASSES)))        # (1, 128)

    packed = jnp.zeros((TOTAL_ROWS, LANES), jnp.float32)
    packed = packed.at[ROW_WIH:ROW_WIH + IP].set(wih_t)
    packed = packed.at[ROW_WHH:ROW_WHH + H].set(whh_t)
    packed = packed.at[ROW_B].set(b[0])
    packed = packed.at[ROW_W1:ROW_W1 + H].set(w1_t)
    packed = packed.at[ROW_B1].set(b1_r[0])
    packed = packed.at[ROW_W2:ROW_W2 + FC1_SIZE].set(w2_t)
    packed = packed.at[ROW_B2].set(b2_r[0])
    packed = packed.at[ROW_POST].set(post_a)
    packed = packed.at[ROW_POST + 1].set(post_b)
    return packed


def _lstm_forward_impl(x, packed):
    """x: (B, T, I) float32 (batch_first). packed: prepare_params output."""
    B, T, I = x.shape
    B_pad = ((max(B, 8) + 7) // 8) * 8

    # time-major, pad (batch, feature), flatten (T, Bp, IP) -> (T*Bp, IP);
    # all of this is inside the jit so it fuses into one copy.
    x_tm = jnp.transpose(x, (1, 0, 2))                        # (T, B, I)
    x_tm = jnp.pad(x_tm, ((0, 0), (0, B_pad - B), (0, IP - I)))
    x_2d = x_tm.reshape(T * B_pad, IP)

    vmem = pl.BlockSpec(memory_space=pltpu.MemorySpace.VMEM)
    out_padded = pl.pallas_call(
        lstm_mlp_kernel,
        out_shape=jax.ShapeDtypeStruct((B_pad, LANES), jnp.float32),
        in_specs=[vmem, vmem],
        out_specs=vmem,
    )(x_2d, packed)
    return out_padded[:B, :NUM_CLASSES]


lstm_forward = jax.jit(_lstm_forward_impl)


def init_params(key, input_size, hidden_size, fc1_size, num_classes):
    """Deterministic PyTorch-style uniform(-1/sqrt(fan), 1/sqrt(fan)) init."""
    ks = jax.random.split(key, 8)
    s_lstm = 1.0 / jnp.sqrt(hidden_size)
    s_fc1 = 1.0 / jnp.sqrt(hidden_size)
    s_fc2 = 1.0 / jnp.sqrt(fc1_size)
    w_ih = jax.random.uniform(ks[0], (4 * hidden_size, input_size),
                              jnp.float32, -s_lstm, s_lstm)
    w_hh = jax.random.uniform(ks[1], (4 * hidden_size, hidden_size),
                              jnp.float32, -s_lstm, s_lstm)
    b_ih = jax.random.uniform(ks[2], (4 * hidden_size,), jnp.float32, -s_lstm, s_lstm)
    b_hh = jax.random.uniform(ks[3], (4 * hidden_size,), jnp.float32, -s_lstm, s_lstm)
    w1 = jax.random.uniform(ks[4], (fc1_size, hidden_size), jnp.float32, -s_fc1, s_fc1)
    b1 = jax.random.uniform(ks[5], (fc1_size,), jnp.float32, -s_fc1, s_fc1)
    w2 = jax.random.uniform(ks[6], (num_classes, fc1_size), jnp.float32, -s_fc2, s_fc2)
    b2 = jax.random.uniform(ks[7], (num_classes,), jnp.float32, -s_fc2, s_fc2)
    return (w_ih, w_hh, b_ih, b_hh, w1, b1, w2, b2)


def reference_forward(x, params):
    """Pure-JAX reference with the original module's semantics."""
    w_ih, w_hh, b_ih, b_hh, w1, b1, w2, b2 = params
    B, T, I = x.shape
    H = w_hh.shape[1]
    h = jnp.zeros((B, H), jnp.float32)
    c = jnp.zeros((B, H), jnp.float32)
    for t in range(T):
        gates = x[:, t, :] @ w_ih.T + b_ih + h @ w_hh.T + b_hh
        i = jax.nn.sigmoid(gates[:, 0:H])
        f = jax.nn.sigmoid(gates[:, H:2 * H])
        g = jnp.tanh(gates[:, 2 * H:3 * H])
        o = jax.nn.sigmoid(gates[:, 3 * H:4 * H])
        c = f * c + i * g
        h = o * jnp.tanh(c)
    out = jnp.maximum(h, 0.0)          # dropout (eval) + ReLU
    out = jnp.maximum(out @ w1.T + b1, 0.0)
    return out @ w2.T + b2


if __name__ == "__main__":
    key = jax.random.PRNGKey(0)
    k_x, k_p = jax.random.split(key)

    B, T = 2, 8
    x = jax.random.normal(k_x, (B, T, INPUT_SIZE), jnp.float32)
    params = init_params(k_p, INPUT_SIZE, HIDDEN_SIZE, FC1_SIZE, NUM_CLASSES)

    # one-time weight preparation (done at init/load, not per forward)
    packed = jax.block_until_ready(prepare_params(params))

    out = lstm_forward(x, packed)
    out = jax.block_until_ready(out)

    ref = reference_forward(x, params)
    assert out.shape == (B, NUM_CLASSES), out.shape
    assert jnp.allclose(out, ref, atol=1e-4, rtol=1e-4), (out, ref)

    print("KERNEL_OK")
</pallas_src>

<mosaic_0001>
module attributes {stable_mosaic.version = 11 : i64} {
  func.func @lstm_mlp_kernel(%arg0: memref<64x64xf32, #tpu.memory_space<vmem>>, %arg1: memref<288x128xf32, #tpu.memory_space<vmem>>, %arg2: memref<8x128xf32, #tpu.memory_space<vmem>>) attributes {dimension_semantics = [], scalar_prefetch = 0 : i64, scratch_operands = 0 : i64, tpu.core_type = #tpu.core_type<tc>} {
    %c0 = arith.constant 0 : index
    %c0_0 = arith.constant 0 : index
    %0 = vector.load %arg1[%c0, %c0_0] : memref<288x128xf32, #tpu.memory_space<vmem>>, vector<64x128xf32>
    %c64 = arith.constant 64 : index
    %c0_1 = arith.constant 0 : index
    %1 = vector.load %arg1[%c64, %c0_1] : memref<288x128xf32, #tpu.memory_space<vmem>>, vector<32x128xf32>
    %c96 = arith.constant 96 : index
    %c0_2 = arith.constant 0 : index
    %2 = vector.load %arg1[%c96, %c0_2] : memref<288x128xf32, #tpu.memory_space<vmem>>, vector<1x128xf32>
    %c104 = arith.constant 104 : index
    %c0_3 = arith.constant 0 : index
    %3 = vector.load %arg1[%c104, %c0_3] : memref<288x128xf32, #tpu.memory_space<vmem>>, vector<32x128xf32>
    %c136 = arith.constant 136 : index
    %c0_4 = arith.constant 0 : index
    %4 = vector.load %arg1[%c136, %c0_4] : memref<288x128xf32, #tpu.memory_space<vmem>>, vector<1x128xf32>
    %c144 = arith.constant 144 : index
    %c0_5 = arith.constant 0 : index
    %5 = vector.load %arg1[%c144, %c0_5] : memref<288x128xf32, #tpu.memory_space<vmem>>, vector<128x128xf32>
    %c272 = arith.constant 272 : index
    %c0_6 = arith.constant 0 : index
    %6 = vector.load %arg1[%c272, %c0_6] : memref<288x128xf32, #tpu.memory_space<vmem>>, vector<1x128xf32>
    %c280 = arith.constant 280 : index
    %c0_7 = arith.constant 0 : index
    %7 = vector.load %arg1[%c280, %c0_7] : memref<288x128xf32, #tpu.memory_space<vmem>>, vector<1x128xf32>
    %c281 = arith.constant 281 : index
    %c0_8 = arith.constant 0 : index
    %8 = vector.load %arg1[%c281, %c0_8] : memref<288x128xf32, #tpu.memory_space<vmem>>, vector<1x128xf32>
    %c0_9 = arith.constant 0 : index
    %c0_10 = arith.constant 0 : index
    %9 = vector.load %arg0[%c0_9, %c0_10] : memref<64x64xf32, #tpu.memory_space<vmem>>, vector<64x64xf32>
    %cst = arith.constant dense<0.000000e+00> : vector<64x128xf32>
    %10 = tpu.matmul %9, %0, %cst {dimension_numbers = #tpu.dot_dimension_numbers<[1], [0], [0], [1], [0, 0, 1, 1], [], []>} : vector<64x64xf32>, vector<64x128xf32>, vector<64x128xf32> -> vector<64x128xf32>
    %11 = vector.broadcast %2 : vector<1x128xf32> to vector<64x128xf32>
    %12 = arith.addf %10, %11 : vector<64x128xf32>
    %cst_11 = arith.constant 0.000000e+00 : f32
    %13 = vector.broadcast %cst_11 : f32 to vector<8x32xf32>
    %cst_12 = arith.constant 0.000000e+00 : f32
    %14 = vector.broadcast %cst_12 : f32 to vector<8x32xf32>
    %15 = vector.extract_strided_slice %12 {offsets = [0, 0], sizes = [8, 128], strides = [1, 1]} : vector<64x128xf32> to vector<8x128xf32>
    %cst_13 = arith.constant dense<0.000000e+00> : vector<8x128xf32>
    %16 = tpu.matmul %13, %1, %cst_13 {dimension_numbers = #tpu.dot_dimension_numbers<[1], [0], [0], [1], [0, 0, 1, 1], [], []>} : vector<8x32xf32>, vector<32x128xf32>, vector<8x128xf32> -> vector<8x128xf32>
    %17 = arith.addf %15, %16 : vector<8x128xf32>
    %18 = math.tanh %17 : vector<8x128xf32>
    %19 = vector.broadcast %7 : vector<1x128xf32> to vector<8x128xf32>
    %20 = arith.mulf %18, %19 : vector<8x128xf32>
    %21 = vector.broadcast %8 : vector<1x128xf32> to vector<8x128xf32>
    %22 = arith.addf %20, %21 : vector<8x128xf32>
    %23 = vector.extract_strided_slice %22 {offsets = [0, 0], sizes = [8, 32], strides = [1, 1]} : vector<8x128xf32> to vector<8x32xf32>
    %24 = vector.extract_strided_slice %22 {offsets = [0, 32], sizes = [8, 32], strides = [1, 1]} : vector<8x128xf32> to vector<8x32xf32>
    %25 = vector.extract_strided_slice %22 {offsets = [0, 64], sizes = [8, 32], strides = [1, 1]} : vector<8x128xf32> to vector<8x32xf32>
    %26 = vector.extract_strided_slice %22 {offsets = [0, 96], sizes = [8, 32], strides = [1, 1]} : vector<8x128xf32> to vector<8x32xf32>
    %27 = arith.mulf %24, %14 : vector<8x32xf32>
    %28 = arith.mulf %23, %25 : vector<8x32xf32>
    %29 = arith.addf %27, %28 : vector<8x32xf32>
    %30 = math.tanh %29 : vector<8x32xf32>
    %31 = arith.mulf %26, %30 : vector<8x32xf32>
    %32 = vector.extract_strided_slice %12 {offsets = [8, 0], sizes = [8, 128], strides = [1, 1]} : vector<64x128xf32> to vector<8x128xf32>
    %cst_14 = arith.constant dense<0.000000e+00> : vector<8x128xf32>
    %33 = tpu.matmul %31, %1, %cst_14 {dimension_numbers = #tpu.dot_dimension_numbers<[1], [0], [0], [1], [0, 0, 1, 1], [], []>} : vector<8x32xf32>, vector<32x128xf32>, vector<8x128xf32> -> vector<8x128xf32>
    %34 = arith.addf %32, %33 : vector<8x128xf32>
    %35 = math.tanh %34 : vector<8x128xf32>
    %36 = vector.broadcast %7 : vector<1x128xf32> to vector<8x128xf32>
    %37 = arith.mulf %35, %36 : vector<8x128xf32>
    %38 = vector.broadcast %8 : vector<1x128xf32> to vector<8x128xf32>
    %39 = arith.addf %37, %38 : vector<8x128xf32>
    %40 = vector.extract_strided_slice %39 {offsets = [0, 0], sizes = [8, 32], strides = [1, 1]} : vector<8x128xf32> to vector<8x32xf32>
    %41 = vector.extract_strided_slice %39 {offsets = [0, 32], sizes = [8, 32], strides = [1, 1]} : vector<8x128xf32> to vector<8x32xf32>
    %42 = vector.extract_strided_slice %39 {offsets = [0, 64], sizes = [8, 32], strides = [1, 1]} : vector<8x128xf32> to vector<8x32xf32>
    %43 = vector.extract_strided_slice %39 {offsets = [0, 96], sizes = [8, 32], strides = [1, 1]} : vector<8x128xf32> to vector<8x32xf32>
    %44 = arith.mulf %41, %29 : vector<8x32xf32>
    %45 = arith.mulf %40, %42 : vector<8x32xf32>
    %46 = arith.addf %44, %45 : vector<8x32xf32>
    %47 = math.tanh %46 : vector<8x32xf32>
    %48 = arith.mulf %43, %47 : vector<8x32xf32>
    %49 = vector.extract_strided_slice %12 {offsets = [16, 0], sizes = [8, 128], strides = [1, 1]} : vector<64x128xf32> to vector<8x128xf32>
    %cst_15 = arith.constant dense<0.000000e+00> : vector<8x128xf32>
    %50 = tpu.matmul %48, %1, %cst_15 {dimension_numbers = #tpu.dot_dimension_numbers<[1], [0], [0], [1], [0, 0, 1, 1], [], []>} : vector<8x32xf32>, vector<32x128xf32>, vector<8x128xf32> -> vector<8x128xf32>
    %51 = arith.addf %49, %50 : vector<8x128xf32>
    %52 = math.tanh %51 : vector<8x128xf32>
    %53 = vector.broadcast %7 : vector<1x128xf32> to vector<8x128xf32>
    %54 = arith.mulf %52, %53 : vector<8x128xf32>
    %55 = vector.broadcast %8 : vector<1x128xf32> to vector<8x128xf32>
    %56 = arith.addf %54, %55 : vector<8x128xf32>
    %57 = vector.extract_strided_slice %56 {offsets = [0, 0], sizes = [8, 32], strides = [1, 1]} : vector<8x128xf32> to vector<8x32xf32>
    %58 = vector.extract_strided_slice %56 {offsets = [0, 32], sizes = [8, 32], strides = [1, 1]} : vector<8x128xf32> to vector<8x32xf32>
    %59 = vector.extract_strided_slice %56 {offsets = [0, 64], sizes = [8, 32], strides = [1, 1]} : vector<8x128xf32> to vector<8x32xf32>
    %60 = vector.extract_strided_slice %56 {offsets = [0, 96], sizes = [8, 32], strides = [1, 1]} : vector<8x128xf32> to vector<8x32xf32>
    %61 = arith.mulf %58, %46 : vector<8x32xf32>
    %62 = arith.mulf %57, %59 : vector<8x32xf32>
    %63 = arith.addf %61, %62 : vector<8x32xf32>
    %64 = math.tanh %63 : vector<8x32xf32>
    %65 = arith.mulf %60, %64 : vector<8x32xf32>
    %66 = vector.extract_strided_slice %12 {offsets = [24, 0], sizes = [8, 128], strides = [1, 1]} : vector<64x128xf32> to vector<8x128xf32>
    %cst_16 = arith.constant dense<0.000000e+00> : vector<8x128xf32>
    %67 = tpu.matmul %65, %1, %cst_16 {dimension_numbers = #tpu.dot_dimension_numbers<[1], [0], [0], [1], [0, 0, 1, 1], [], []>} : vector<8x32xf32>, vector<32x128xf32>, vector<8x128xf32> -> vector<8x128xf32>
    %68 = arith.addf %66, %67 : vector<8x128xf32>
    %69 = math.tanh %68 : vector<8x128xf32>
    %70 = vector.broadcast %7 : vector<1x128xf32> to vector<8x128xf32>
    %71 = arith.mulf %69, %70 : vector<8x128xf32>
    %72 = vector.broadcast %8 : vector<1x128xf32> to vector<8x128xf32>
    %73 = arith.addf %71, %72 : vector<8x128xf32>
    %74 = vector.extract_strided_slice %73 {offsets = [0, 0], sizes = [8, 32], strides = [1, 1]} : vector<8x128xf32> to vector<8x32xf32>
    %75 = vector.extract_strided_slice %73 {offsets = [0, 32], sizes = [8, 32], strides = [1, 1]} : vector<8x128xf32> to vector<8x32xf32>
    %76 = vector.extract_strided_slice %73 {offsets = [0, 64], sizes = [8, 32], strides = [1, 1]} : vector<8x128xf32> to vector<8x32xf32>
    %77 = vector.extract_strided_slice %73 {offsets = [0, 96], sizes = [8, 32], strides = [1, 1]} : vector<8x128xf32> to vector<8x32xf32>
    %78 = arith.mulf %75, %63 : vector<8x32xf32>
    %79 = arith.mulf %74, %76 : vector<8x32xf32>
    %80 = arith.addf %78, %79 : vector<8x32xf32>
    %81 = math.tanh %80 : vector<8x32xf32>
    %82 = arith.mulf %77, %81 : vector<8x32xf32>
    %83 = vector.extract_strided_slice %12 {offsets = [32, 0], sizes = [8, 128], strides = [1, 1]} : vector<64x128xf32> to vector<8x128xf32>
    %cst_17 = arith.constant dense<0.000000e+00> : vector<8x128xf32>
    %84 = tpu.matmul %82, %1, %cst_17 {dimension_numbers = #tpu.dot_dimension_numbers<[1], [0], [0], [1], [0, 0, 1, 1], [], []>} : vector<8x32xf32>, vector<32x128xf32>, vector<8x128xf32> -> vector<8x128xf32>
    %85 = arith.addf %83, %84 : vector<8x128xf32>
    %86 = math.tanh %85 : vector<8x128xf32>
    %87 = vector.broadcast %7 : vector<1x128xf32> to vector<8x128xf32>
    %88 = arith.mulf %86, %87 : vector<8x128xf32>
    %89 = vector.broadcast %8 : vector<1x128xf32> to vector<8x128xf32>
    %90 = arith.addf %88, %89 : vector<8x128xf32>
    %91 = vector.extract_strided_slice %90 {offsets = [0, 0], sizes = [8, 32], strides = [1, 1]} : vector<8x128xf32> to vector<8x32xf32>
    %92 = vector.extract_strided_slice %90 {offsets = [0, 32], sizes = [8, 32], strides = [1, 1]} : vector<8x128xf32> to vector<8x32xf32>
    %93 = vector.extract_strided_slice %90 {offsets = [0, 64], sizes = [8, 32], strides = [1, 1]} : vector<8x128xf32> to vector<8x32xf32>
    %94 = vector.extract_strided_slice %90 {offsets = [0, 96], sizes = [8, 32], strides = [1, 1]} : vector<8x128xf32> to vector<8x32xf32>
    %95 = arith.mulf %92, %80 : vector<8x32xf32>
    %96 = arith.mulf %91, %93 : vector<8x32xf32>
    %97 = arith.addf %95, %96 : vector<8x32xf32>
    %98 = math.tanh %97 : vector<8x32xf32>
    %99 = arith.mulf %94, %98 : vector<8x32xf32>
    %100 = vector.extract_strided_slice %12 {offsets = [40, 0], sizes = [8, 128], strides = [1, 1]} : vector<64x128xf32> to vector<8x128xf32>
    %cst_18 = arith.constant dense<0.000000e+00> : vector<8x128xf32>
    %101 = tpu.matmul %99, %1, %cst_18 {dimension_numbers = #tpu.dot_dimension_numbers<[1], [0], [0], [1], [0, 0, 1, 1], [], []>} : vector<8x32xf32>, vector<32x128xf32>, vector<8x128xf32> -> vector<8x128xf32>
    %102 = arith.addf %100, %101 : vector<8x128xf32>
    %103 = math.tanh %102 : vector<8x128xf32>
    %104 = vector.broadcast %7 : vector<1x128xf32> to vector<8x128xf32>
    %105 = arith.mulf %103, %104 : vector<8x128xf32>
    %106 = vector.broadcast %8 : vector<1x128xf32> to vector<8x128xf32>
    %107 = arith.addf %105, %106 : vector<8x128xf32>
    %108 = vector.extract_strided_slice %107 {offsets = [0, 0], sizes = [8, 32], strides = [1, 1]} : vector<8x128xf32> to vector<8x32xf32>
    %109 = vector.extract_strided_slice %107 {offsets = [0, 32], sizes = [8, 32], strides = [1, 1]} : vector<8x128xf32> to vector<8x32xf32>
    %110 = vector.extract_strided_slice %107 {offsets = [0, 64], sizes = [8, 32], strides = [1, 1]} : vector<8x128xf32> to vector<8x32xf32>
    %111 = vector.extract_strided_slice %107 {offsets = [0, 96], sizes = [8, 32], strides = [1, 1]} : vector<8x128xf32> to vector<8x32xf32>
    %112 = arith.mulf %109, %97 : vector<8x32xf32>
    %113 = arith.mulf %108, %110 : vector<8x32xf32>
    %114 = arith.addf %112, %113 : vector<8x32xf32>
    %115 = math.tanh %114 : vector<8x32xf32>
    %116 = arith.mulf %111, %115 : vector<8x32xf32>
    %117 = vector.extract_strided_slice %12 {offsets = [48, 0], sizes = [8, 128], strides = [1, 1]} : vector<64x128xf32> to vector<8x128xf32>
    %cst_19 = arith.constant dense<0.000000e+00> : vector<8x128xf32>
    %118 = tpu.matmul %116, %1, %cst_19 {dimension_numbers = #tpu.dot_dimension_numbers<[1], [0], [0], [1], [0, 0, 1, 1], [], []>} : vector<8x32xf32>, vector<32x128xf32>, vector<8x128xf32> -> vector<8x128xf32>
    %119 = arith.addf %117, %118 : vector<8x128xf32>
    %120 = math.tanh %119 : vector<8x128xf32>
    %121 = vector.broadcast %7 : vector<1x128xf32> to vector<8x128xf32>
    %122 = arith.mulf %120, %121 : vector<8x128xf32>
    %123 = vector.broadcast %8 : vector<1x128xf32> to vector<8x128xf32>
    %124 = arith.addf %122, %123 : vector<8x128xf32>
    %125 = vector.extract_strided_slice %124 {offsets = [0, 0], sizes = [8, 32], strides = [1, 1]} : vector<8x128xf32> to vector<8x32xf32>
    %126 = vector.extract_strided_slice %124 {offsets = [0, 32], sizes = [8, 32], strides = [1, 1]} : vector<8x128xf32> to vector<8x32xf32>
    %127 = vector.extract_strided_slice %124 {offsets = [0, 64], sizes = [8, 32], strides = [1, 1]} : vector<8x128xf32> to vector<8x32xf32>
    %128 = vector.extract_strided_slice %124 {offsets = [0, 96], sizes = [8, 32], strides = [1, 1]} : vector<8x128xf32> to vector<8x32xf32>
    %129 = arith.mulf %126, %114 : vector<8x32xf32>
    %130 = arith.mulf %125, %127 : vector<8x32xf32>
    %131 = arith.addf %129, %130 : vector<8x32xf32>
    %132 = math.tanh %131 : vector<8x32xf32>
    %133 = arith.mulf %128, %132 : vector<8x32xf32>
    %134 = vector.extract_strided_slice %12 {offsets = [56, 0], sizes = [8, 128], strides = [1, 1]} : vector<64x128xf32> to vector<8x128xf32>
    %cst_20 = arith.constant dense<0.000000e+00> : vector<8x128xf32>
    %135 = tpu.matmul %133, %1, %cst_20 {dimension_numbers = #tpu.dot_dimension_numbers<[1], [0], [0], [1], [0, 0, 1, 1], [], []>} : vector<8x32xf32>, vector<32x128xf32>, vector<8x128xf32> -> vector<8x128xf32>
    %136 = arith.addf %134, %135 : vector<8x128xf32>
    %137 = math.tanh %136 : vector<8x128xf32>
    %138 = vector.broadcast %7 : vector<1x128xf32> to vector<8x128xf32>
    %139 = arith.mulf %137, %138 : vector<8x128xf32>
    %140 = vector.broadcast %8 : vector<1x128xf32> to vector<8x128xf32>
    %141 = arith.addf %139, %140 : vector<8x128xf32>
    %142 = vector.extract_strided_slice %141 {offsets = [0, 0], sizes = [8, 32], strides = [1, 1]} : vector<8x128xf32> to vector<8x32xf32>
    %143 = vector.extract_strided_slice %141 {offsets = [0, 32], sizes = [8, 32], strides = [1, 1]} : vector<8x128xf32> to vector<8x32xf32>
    %144 = vector.extract_strided_slice %141 {offsets = [0, 64], sizes = [8, 32], strides = [1, 1]} : vector<8x128xf32> to vector<8x32xf32>
    %145 = vector.extract_strided_slice %141 {offsets = [0, 96], sizes = [8, 32], strides = [1, 1]} : vector<8x128xf32> to vector<8x32xf32>
    %146 = arith.mulf %143, %131 : vector<8x32xf32>
    %147 = arith.mulf %142, %144 : vector<8x32xf32>
    %148 = arith.addf %146, %147 : vector<8x32xf32>
    %149 = math.tanh %148 : vector<8x32xf32>
    %150 = arith.mulf %145, %149 : vector<8x32xf32>
    %cst_21 = arith.constant 0.000000e+00 : f32
    %151 = vector.broadcast %cst_21 : f32 to vector<8x32xf32>
    %152 = arith.maximumf %150, %151 : vector<8x32xf32>
    %cst_22 = arith.constant dense<0.000000e+00> : vector<8x128xf32>
    %153 = tpu.matmul %152, %3, %cst_22 {dimension_numbers = #tpu.dot_dimension_numbers<[1], [0], [0], [1], [0, 0, 1, 1], [], []>} : vector<8x32xf32>, vector<32x128xf32>, vector<8x128xf32> -> vector<8x128xf32>
    %154 = vector.broadcast %4 : vector<1x128xf32> to vector<8x128xf32>
    %155 = arith.addf %153, %154 : vector<8x128xf32>
    %cst_23 = arith.constant 0.000000e+00 : f32
    %156 = vector.broadcast %cst_23 : f32 to vector<8x128xf32>
    %157 = arith.maximumf %155, %156 : vector<8x128xf32>
    %cst_24 = arith.constant dense<0.000000e+00> : vector<8x128xf32>
    %158 = tpu.matmul %157, %5, %cst_24 {dimension_numbers = #tpu.dot_dimension_numbers<[1], [0], [0], [1], [0, 0, 1, 1], [], []>} : vector<8x128xf32>, vector<128x128xf32>, vector<8x128xf32> -> vector<8x128xf32>
    %159 = vector.broadcast %6 : vector<1x128xf32> to vector<8x128xf32>
    %160 = arith.addf %158, %159 : vector<8x128xf32>
    %c0_25 = arith.constant 0 : index
    %c0_26 = arith.constant 0 : index
    %161 = vector.load %arg2[%c0_25, %c0_26] : memref<8x128xf32, #tpu.memory_space<vmem>>, vector<8x128xf32>
    tpu.vector_store %arg2[%c0_25, %c0_26], %160 {strides = array<i32>} : memref<8x128xf32, #tpu.memory_space<vmem>>, vector<8x128xf32>,
    return
  }
}

</mosaic_0001>

<llo_original>
// kernel: _lstm_forward_impl.1
$region0: #{_lstm_forward_impl.1}
  #allocation0 [shape = 'u32[]', space=smem, size = 0x4, offset = 0x4, fixed_abs, tag = 'smem constant byte address 0x4 - core index']
  #allocation1 [shape = 'u32[72,128]{1,0:T(1,128)}', space=vmem, size = 0x9000, scoped, tag = 'internal scratch']
  %s0 = inlined_call_operand.vmem [shape: f32[64,64], index: 0, kind: input, shape index: {}]
  %s1 = inlined_call_operand.hbm [shape: f32[288,128], index: 1, kind: input, shape index: {}]
  %s2 = inlined_call_operand.vmem [shape: f32[8,128], index: 2, kind: output, shape index: {}]
  %s3 = sld [smem:[#allocation0]]
  $region22: #{_lstm_forward_impl.1} parent=0
    _
  %s5 = ssub.s32 1, %s3
  %s6 = scalar_select 0, %s5, %s3
  $region1: #{_lstm_forward_impl.1} parent=0
    #allocation2 [shape = 'u8[147456]{0}', space=vmem, size = 0x24000, scoped, tag = 'input window, operand 1, single buffered']
    #allocation3 [shape = 's32[1]{0}', space=sflag, size = 0x4, scoped, tag = 'scoped memory for _lstm_forward_impl.1']
    %7 = vsyncpa [#allocation3], 0
    // Predicated region
    $region2: #{_lstm_forward_impl.1} parent=1 // pred_check
      _
    $region3: #{_lstm_forward_impl.1} parent=1 // pred_check_branch
      %9 = sbr.rel (0) target = $region5
    $region4: #{_lstm_forward_impl.1} parent=1 // pred_region
      _
    $region5: #{_lstm_forward_impl.1} parent=1 // pred_fallthru
      _
    // Predicated region
    $region6: #{_lstm_forward_impl.1} parent=1 // pred_check
      _
    $region7: #{_lstm_forward_impl.1} parent=1 // pred_check_branch
      %11 = sbr.rel (0) target = $region9
    $region8: #{_lstm_forward_impl.1} parent=1 // pred_region
      %13 = vsyncadd [#allocation3], 0
      %s14 = sshll.u32 %s1, 4
      %s15 = int_to_ptr.hbm [resolvable:$true] %s14
      %s16 = sshll.u32 [#allocation2], 4
      %s17 = int_to_ptr.vmem [resolvable:$true] %s16
      %22 = dma.hbm_to_vmem [thread:$0]  %s15, 4608, %s17, [#allocation3], 128, 128, 8
    $region9: #{_lstm_forward_impl.1} parent=1 // pred_fallthru
      _
    // Predicated region
    $region10: #{_lstm_forward_impl.1} parent=1 // pred_check
      _
    $region11: #{_lstm_forward_impl.1} parent=1 // pred_check_branch
      %24 = sbr.rel (0) target = $region13
    $region12: #{_lstm_forward_impl.1} parent=1 // pred_region
      %26 = dma.done [#allocation3], 4608
    $region13: #{_lstm_forward_impl.1} parent=1 // pred_fallthru
      _
    %v27 = vld [vmem:[#allocation2] sm:$0xff]
    %v28 = vld [vmem:[#allocation2 + $0x8] sm:$0xff]
    %v29 = vld [vmem:[#allocation2 + $0x10] sm:$0xff]
    %v30 = vld [vmem:[#allocation2 + $0x18] sm:$0xff]
    %v31 = vld [vmem:[#allocation2 + $0x20] sm:$0xff]
    %v32 = vld [vmem:[#allocation2 + $0x28] sm:$0xff]
    %v33 = vld [vmem:[#allocation2 + $0x30] sm:$0xff]
    %v34 = vld [vmem:[#allocation2 + $0x38] sm:$0xff]
    %v35 = vld [vmem:[#allocation2 + $0x40] sm:$0xff]
    %v36 = vld [vmem:[#allocation2 + $0x48] sm:$0xff]
    %v37 = vld [vmem:[#allocation2 + $0x50] sm:$0xff]
    %v38 = vld [vmem:[#allocation2 + $0x58] sm:$0xff]
    %v39 = vld [vmem:[#allocation2 + $0x60] sm:$0x1]
    %v40 = vld [vmem:[#allocation2 + $0x68] sm:$0xff]
    %v41 = vld [vmem:[#allocation2 + $0x70] sm:$0xff]
    %v42 = vld [vmem:[#allocation2 + $0x78] sm:$0xff]
    %v43 = vld [vmem:[#allocation2 + $0x80] sm:$0xff]
    %v44 = vld [vmem:[#allocation2 + $0x88] sm:$0x1]
    %v45 = vld [vmem:[#allocation2 + $0x90] sm:$0xff]
    %v46 = vld [vmem:[#allocation2 + $0x98] sm:$0xff]
    %v47 = vld [vmem:[#allocation2 + $0xa0] sm:$0xff]
    %v48 = vld [vmem:[#allocation2 + $0xa8] sm:$0xff]
    %v49 = vld [vmem:[#allocation2 + $0xb0] sm:$0xff]
    %v50 = vld [vmem:[#allocation2 + $0xb8] sm:$0xff]
    %v51 = vld [vmem:[#allocation2 + $0xc0] sm:$0xff]
    %v52 = vld [vmem:[#allocation2 + $0xc8] sm:$0xff]
    %v53 = vld [vmem:[#allocation2 + $0xd0] sm:$0xff]
    %v54 = vld [vmem:[#allocation2 + $0xd8] sm:$0xff]
    %v55 = vld [vmem:[#allocation2 + $0xe0] sm:$0xff]
    %v56 = vld [vmem:[#allocation2 + $0xe8] sm:$0xff]
    %v57 = vld [vmem:[#allocation2 + $0xf0] sm:$0xff]
    %v58 = vld [vmem:[#allocation2 + $0xf8] sm:$0xff]
    %v59 = vld [vmem:[#allocation2 + $0x100] sm:$0xff]
    %v60 = vld [vmem:[#allocation2 + $0x108] sm:$0xff]
    %v61 = vld [vmem:[#allocation2 + $0x110] sm:$0x1]
    %v62 = vld [vmem:[#allocation2 + $0x118] sm:$0x1]
    %v63 = vld [vmem:[#allocation2 + $0x119] sm:$0x1]
    %v64 = vld [vmem:[%s0] sm:$0xff]
    %v65 = vld [vmem:[%s0 + $0x8] sm:$0xff]
    %v66 = vld [vmem:[%s0 + $0x10] sm:$0xff]
    %v67 = vld [vmem:[%s0 + $0x18] sm:$0xff]
    %v68 = vld [vmem:[%s0 + $0x20] sm:$0xff]
    %v69 = vld [vmem:[%s0 + $0x28] sm:$0xff]
    %v70 = vld [vmem:[%s0 + $0x30] sm:$0xff]
    %v71 = vld [vmem:[%s0 + $0x38] sm:$0xff]
    %v72 = vperm.slane %v39, 0
    %vm73 = vcmask 523264
    %v75 = vsel %vm73, %v64, 0
    %v78 = vsel %vm73, %v65, 0
    %v81 = vsel %vm73, %v66, 0
    %v84 = vsel %vm73, %v67, 0
    %v87 = vsel %vm73, %v68, 0
    %v90 = vsel %vm73, %v69, 0
    %v93 = vsel %vm73, %v70, 0
    %v96 = vsel %vm73, %v71, 0
    %98 = vmatpush.msra.mxu0 0.0
    %99 = vmatpush.msra.mxu0 0.0
    %100 = vmatpush.msra.mxu0 0.0
    %101 = vmatpush.msra.mxu0 0.0
    %102 = vmatpush.msra.mxu0 0.0
    %103 = vmatpush.msra.mxu0 0.0
    %104 = vmatpush.msra.mxu0 0.0
    %105 = vmatpush.msra.mxu0 0.0
    %106 = vmatpush.msra.mxu0 %v34
    %107 = vmatpush.msra.mxu0 %v33
    %108 = vmatpush.msra.mxu0 %v32
    %109 = vmatpush.msra.mxu0 %v31
    %110 = vmatpush.msra.mxu0 %v30
    %111 = vmatpush.msra.mxu0 %v29
    %112 = vmatpush.msra.mxu0 %v28
    %113 = vmatpush.msra.mxu0 %v27
    %114 = vmatmul.f32.gmra.mxu0 %v75
    %v115 = vpop.f32.mrf.mxu0
    %v116 = vadd.f32 %v72, %v115
    %117 = vmatmul.f32.gmra.mxu0 %v78
    %v118 = vpop.f32.mrf.mxu0
    %v119 = vadd.f32 %v72, %v118
    %120 = vmatmul.f32.gmra.mxu0 %v81
    %v121 = vpop.f32.mrf.mxu0
    %v122 = vadd.f32 %v72, %v121
    %123 = vmatmul.f32.gmra.mxu0 %v84
    %v124 = vpop.f32.mrf.mxu0
    %v125 = vadd.f32 %v72, %v124
    %126 = vmatmul.f32.gmra.mxu0 %v87
    %v127 = vpop.f32.mrf.mxu0
    %v128 = vadd.f32 %v72, %v127
    %129 = vmatmul.f32.gmra.mxu0 %v90
    %v130 = vpop.f32.mrf.mxu0
    %v131 = vadd.f32 %v72, %v130
    %132 = vmatmul.f32.gmra.mxu0 %v93
    %v133 = vpop.f32.mrf.mxu0
    %v134 = vadd.f32 %v72, %v133
    %135 = vmatmul.f32.gmra.mxu0 %v96
    %v136 = vpop.f32.mrf.mxu0
    %v137 = vadd.f32 %v72, %v136
    %138 = vdwg.mxu0
    %vm139 = vcmask 261120
    %v141 = vsel %vm139, 0.0, 0
    %143 = vmatpush.msra.mxu0 0.0
    %144 = vmatpush.msra.mxu0 0.0
    %145 = vmatpush.msra.mxu0 0.0
    %146 = vmatpush.msra.mxu0 0.0
    %147 = vmatpush.msra.mxu0 0.0
    %148 = vmatpush.msra.mxu0 0.0
    %149 = vmatpush.msra.mxu0 0.0
    %150 = vmatpush.msra.mxu0 0.0
    %151 = vmatpush.msra.mxu0 0.0
    %152 = vmatpush.msra.mxu0 0.0
    %153 = vmatpush.msra.mxu0 0.0
    %154 = vmatpush.msra.mxu0 0.0
    %155 = vmatpush.msra.mxu0 %v38
    %156 = vmatpush.msra.mxu0 %v37
    %157 = vmatpush.msra.mxu0 %v36
    %158 = vmatpush.msra.mxu0 %v35
    %159 = vmatmul.f32.gmra.mxu0 %v141
    %v160 = vpop.f32.mrf.mxu0
    %v161 = vadd.f32 0.0, %v160
    %162 = vdwg.mxu0
    %v163 = vadd.f32 %v116, %v161
    %v164 = vtanh.pop %v163
    %v165 = vperm.slane %v62, 0
    %v166 = vmul.f32 %v164, %v165
    %v167 = vperm.slane %v63, 0
    %v168 = vadd.f32 %v166, %v167
    %v169 = vmul.f32 %v168, 0.0
    %171 = vrot.lane.b32.xlu0 %v168, 64
    %v172 = vpop.permute.xlu0 %171
    %v174 = vmul.f32 %v168, %v172
    %176 = vrot.lane.b32.xlu0 %v174, 32
    %v177 = vpop.permute.xlu0 %176
    %v179 = vadd.f32 %v169, %v177
    %v180 = vtanh.pop %v179
    %182 = vrot.lane.b32.xlu0 %v180, 64
    %v183 = vpop.permute.xlu0 %182
    %v185 = vmul.f32 %v168, %v183
    %187 = vrot.lane.b32.xlu0 %v185, 32
    %v188 = vpop.permute.xlu0 %187
    %v189 = vsel %vm139, %v188, 0
    %191 = vmatpush.msra.mxu0 0.0
    %192 = vmatpush.msra.mxu0 0.0
    %193 = vmatpush.msra.mxu0 0.0
    %194 = vmatpush.msra.mxu0 0.0
    %195 = vmatpush.msra.mxu0 0.0
    %196 = vmatpush.msra.mxu0 0.0
    %197 = vmatpush.msra.mxu0 0.0
    %198 = vmatpush.msra.mxu0 0.0
    %199 = vmatpush.msra.mxu0 0.0
    %200 = vmatpush.msra.mxu0 0.0
    %201 = vmatpush.msra.mxu0 0.0
    %202 = vmatpush.msra.mxu0 0.0
    %203 = vmatpush.msra.mxu0 %v38
    %204 = vmatpush.msra.mxu0 %v37
    %205 = vmatpush.msra.mxu0 %v36
    %206 = vmatpush.msra.mxu0 %v35
    %207 = vmatmul.f32.gmra.mxu0 %v189
    %v208 = vpop.f32.mrf.mxu0
    %v209 = vadd.f32 0.0, %v208
    %210 = vdwg.mxu0
    %v211 = vadd.f32 %v119, %v209
    %v212 = vtanh.pop %v211
    %v213 = vmul.f32 %v212, %v165
    %v214 = vadd.f32 %v213, %v167
    %v215 = vmul.f32 %v214, %v179
    %217 = vrot.lane.b32.xlu0 %v214, 64
    %v218 = vpop.permute.xlu0 %217
    %v220 = vmul.f32 %v214, %v218
    %222 = vrot.lane.b32.xlu0 %v220, 32
    %v223 = vpop.permute.xlu0 %222
    %v225 = vadd.f32 %v215, %v223
    %v226 = vtanh.pop %v225
    %228 = vrot.lane.b32.xlu0 %v226, 64
    %v229 = vpop.permute.xlu0 %228
    %v231 = vmul.f32 %v214, %v229
    %233 = vrot.lane.b32.xlu0 %v231, 32
    %v234 = vpop.permute.xlu0 %233
    %v235 = vsel %vm139, %v234, 0
    %237 = vmatpush.msra.mxu0 0.0
    %238 = vmatpush.msra.mxu0 0.0
    %239 = vmatpush.msra.mxu0 0.0
    %240 = vmatpush.msra.mxu0 0.0
    %241 = vmatpush.msra.mxu0 0.0
    %242 = vmatpush.msra.mxu0 0.0
    %243 = vmatpush.msra.mxu0 0.0
    %244 = vmatpush.msra.mxu0 0.0
    %245 = vmatpush.msra.mxu0 0.0
    %246 = vmatpush.msra.mxu0 0.0
    %247 = vmatpush.msra.mxu0 0.0
    %248 = vmatpush.msra.mxu0 0.0
    %249 = vmatpush.msra.mxu0 %v38
    %250 = vmatpush.msra.mxu0 %v37
    %251 = vmatpush.msra.mxu0 %v36
    %252 = vmatpush.msra.mxu0 %v35
    %253 = vmatmul.f32.gmra.mxu0 %v235
    %v254 = vpop.f32.mrf.mxu0
    %v255 = vadd.f32 0.0, %v254
    %256 = vdwg.mxu0
    %v257 = vadd.f32 %v122, %v255
    %v258 = vtanh.pop %v257
    %v259 = vmul.f32 %v258, %v165
    %v260 = vadd.f32 %v259, %v167
    %v261 = vmul.f32 %v260, %v225
    %263 = vrot.lane.b32.xlu0 %v260, 64
    %v264 = vpop.permute.xlu0 %263
    %v266 = vmul.f32 %v260, %v264
    %268 = vrot.lane.b32.xlu0 %v266, 32
    %v269 = vpop.permute.xlu0 %268
    %v271 = vadd.f32 %v261, %v269
    %v272 = vtanh.pop %v271
    %274 = vrot.lane.b32.xlu0 %v272, 64
    %v275 = vpop.permute.xlu0 %274
    %v277 = vmul.f32 %v260, %v275
    %279 = vrot.lane.b32.xlu0 %v277, 32
    %v280 = vpop.permute.xlu0 %279
    %v281 = vsel %vm139, %v280, 0
    %283 = vmatpush.msra.mxu0 0.0
    %284 = vmatpush.msra.mxu0 0.0
    %285 = vmatpush.msra.mxu0 0.0
    %286 = vmatpush.msra.mxu0 0.0
    %287 = vmatpush.msra.mxu0 0.0
    %288 = vmatpush.msra.mxu0 0.0
    %289 = vmatpush.msra.mxu0 0.0
    %290 = vmatpush.msra.mxu0 0.0
    %291 = vmatpush.msra.mxu0 0.0
    %292 = vmatpush.msra.mxu0 0.0
    %293 = vmatpush.msra.mxu0 0.0
    %294 = vmatpush.msra.mxu0 0.0
    %295 = vmatpush.msra.mxu0 %v38
    %296 = vmatpush.msra.mxu0 %v37
    %297 = vmatpush.msra.mxu0 %v36
    %298 = vmatpush.msra.mxu0 %v35
    %299 = vmatmul.f32.gmra.mxu0 %v281
    %v300 = vpop.f32.mrf.mxu0
    %v301 = vadd.f32 0.0, %v300
    %302 = vdwg.mxu0
    %v303 = vadd.f32 %v125, %v301
    %v304 = vtanh.pop %v303
    %v305 = vmul.f32 %v304, %v165
    %v306 = vadd.f32 %v305, %v167
    %v307 = vmul.f32 %v306, %v271
    %309 = vrot.lane.b32.xlu0 %v306, 64
    %v310 = vpop.permute.xlu0 %309
    %v312 = vmul.f32 %v306, %v310
    %314 = vrot.lane.b32.xlu0 %v312, 32
    %v315 = vpop.permute.xlu0 %314
    %v317 = vadd.f32 %v307, %v315
    %v318 = vtanh.pop %v317
    %320 = vrot.lane.b32.xlu0 %v318, 64
    %v321 = vpop.permute.xlu0 %320
    %v323 = vmul.f32 %v306, %v321
    %325 = vrot.lane.b32.xlu0 %v323, 32
    %v326 = vpop.permute.xlu0 %325
    %v327 = vsel %vm139, %v326, 0
    %329 = vmatpush.msra.mxu0 0.0
    %330 = vmatpush.msra.mxu0 0.0
    %331 = vmatpush.msra.mxu0 0.0
    %332 = vmatpush.msra.mxu0 0.0
    %333 = vmatpush.msra.mxu0 0.0
    %334 = vmatpush.msra.mxu0 0.0
    %335 = vmatpush.msra.mxu0 0.0
    %336 = vmatpush.msra.mxu0 0.0
    %337 = vmatpush.msra.mxu0 0.0
    %338 = vmatpush.msra.mxu0 0.0
    %339 = vmatpush.msra.mxu0 0.0
    %340 = vmatpush.msra.mxu0 0.0
    %341 = vmatpush.msra.mxu0 %v38
    %342 = vmatpush.msra.mxu0 %v37
    %343 = vmatpush.msra.mxu0 %v36
    %344 = vmatpush.msra.mxu0 %v35
    %345 = vmatmul.f32.gmra.mxu0 %v327
    %v346 = vpop.f32.mrf.mxu0
    %v347 = vadd.f32 0.0, %v346
    %348 = vdwg.mxu0
    %v349 = vadd.f32 %v128, %v347
    %v350 = vtanh.pop %v349
    %v351 = vmul.f32 %v350, %v165
    %v352 = vadd.f32 %v351, %v167
    %v353 = vmul.f32 %v352, %v317
    %355 = vrot.lane.b32.xlu0 %v352, 64
    %v356 = vpop.permute.xlu0 %355
    %v358 = vmul.f32 %v352, %v356
    %360 = vrot.lane.b32.xlu0 %v358, 32
    %v361 = vpop.permute.xlu0 %360
    %v363 = vadd.f32 %v353, %v361
    %v364 = vtanh.pop %v363
    %366 = vrot.lane.b32.xlu0 %v364, 64
    %v367 = vpop.permute.xlu0 %366
    %v369 = vmul.f32 %v352, %v367
    %371 = vrot.lane.b32.xlu0 %v369, 32
    %v372 = vpop.permute.xlu0 %371
    %v373 = vsel %vm139, %v372, 0
    %375 = vmatpush.msra.mxu0 0.0
    %376 = vmatpush.msra.mxu0 0.0
    %377 = vmatpush.msra.mxu0 0.0
    %378 = vmatpush.msra.mxu0 0.0
    %379 = vmatpush.msra.mxu0 0.0
    %380 = vmatpush.msra.mxu0 0.0
    %381 = vmatpush.msra.mxu0 0.0
    %382 = vmatpush.msra.mxu0 0.0
    %383 = vmatpush.msra.mxu0 0.0
    %384 = vmatpush.msra.mxu0 0.0
    %385 = vmatpush.msra.mxu0 0.0
    %386 = vmatpush.msra.mxu0 0.0
    %387 = vmatpush.msra.mxu0 %v38
    %388 = vmatpush.msra.mxu0 %v37
    %389 = vmatpush.msra.mxu0 %v36
    %390 = vmatpush.msra.mxu0 %v35
    %391 = vmatmul.f32.gmra.mxu0 %v373
    %v392 = vpop.f32.mrf.mxu0
    %v393 = vadd.f32 0.0, %v392
    %394 = vdwg.mxu0
    %v395 = vadd.f32 %v131, %v393
    %v396 = vtanh.pop %v395
    %v397 = vmul.f32 %v396, %v165
    %v398 = vadd.f32 %v397, %v167
    %v399 = vmul.f32 %v398, %v363
    %401 = vrot.lane.b32.xlu0 %v398, 64
    %v402 = vpop.permute.xlu0 %401
    %v404 = vmul.f32 %v398, %v402
    %406 = vrot.lane.b32.xlu0 %v404, 32
    %v407 = vpop.permute.xlu0 %406
    %v409 = vadd.f32 %v399, %v407
    %v410 = vtanh.pop %v409
    %412 = vrot.lane.b32.xlu0 %v410, 64
    %v413 = vpop.permute.xlu0 %412
    %v415 = vmul.f32 %v398, %v413
    %417 = vrot.lane.b32.xlu0 %v415, 32
    %v418 = vpop.permute.xlu0 %417
    %v419 = vsel %vm139, %v418, 0
    %421 = vmatpush.msra.mxu0 0.0
    %422 = vmatpush.msra.mxu0 0.0
    %423 = vmatpush.msra.mxu0 0.0
    %424 = vmatpush.msra.mxu0 0.0
    %425 = vmatpush.msra.mxu0 0.0
    %426 = vmatpush.msra.mxu0 0.0
    %427 = vmatpush.msra.mxu0 0.0
    %428 = vmatpush.msra.mxu0 0.0
    %429 = vmatpush.msra.mxu0 0.0
    %430 = vmatpush.msra.mxu0 0.0
    %431 = vmatpush.msra.mxu0 0.0
    %432 = vmatpush.msra.mxu0 0.0
    %433 = vmatpush.msra.mxu0 %v38
    %434 = vmatpush.msra.mxu0 %v37
    %435 = vmatpush.msra.mxu0 %v36
    %436 = vmatpush.msra.mxu0 %v35
    %437 = vmatmul.f32.gmra.mxu0 %v419
    %v438 = vpop.f32.mrf.mxu0
    %v439 = vadd.f32 0.0, %v438
    %440 = vdwg.mxu0
    %v441 = vadd.f32 %v134, %v439
    %v442 = vtanh.pop %v441
    %v443 = vmul.f32 %v442, %v165
    %v444 = vadd.f32 %v443, %v167
    %v445 = vmul.f32 %v444, %v409
    %447 = vrot.lane.b32.xlu0 %v444, 64
    %v448 = vpop.permute.xlu0 %447
    %v450 = vmul.f32 %v444, %v448
    %452 = vrot.lane.b32.xlu0 %v450, 32
    %v453 = vpop.permute.xlu0 %452
    %v455 = vadd.f32 %v445, %v453
    %v456 = vtanh.pop %v455
    %458 = vrot.lane.b32.xlu0 %v456, 64
    %v459 = vpop.permute.xlu0 %458
    %v461 = vmul.f32 %v444, %v459
    %463 = vrot.lane.b32.xlu0 %v461, 32
    %v464 = vpop.permute.xlu0 %463
    %v465 = vsel %vm139, %v464, 0
    %467 = vmatpush.msra.mxu0 0.0
    %468 = vmatpush.msra.mxu0 0.0
    %469 = vmatpush.msra.mxu0 0.0
    %470 = vmatpush.msra.mxu0 0.0
    %471 = vmatpush.msra.mxu0 0.0
    %472 = vmatpush.msra.mxu0 0.0
    %473 = vmatpush.msra.mxu0 0.0
    %474 = vmatpush.msra.mxu0 0.0
    %475 = vmatpush.msra.mxu0 0.0
    %476 = vmatpush.msra.mxu0 0.0
    %477 = vmatpush.msra.mxu0 0.0
    %478 = vmatpush.msra.mxu0 0.0
    %479 = vmatpush.msra.mxu0 %v38
    %480 = vmatpush.msra.mxu0 %v37
    %481 = vmatpush.msra.mxu0 %v36
    %482 = vmatpush.msra.mxu0 %v35
    %483 = vmatmul.f32.gmra.mxu0 %v465
    %v484 = vpop.f32.mrf.mxu0
    %v485 = vadd.f32 0.0, %v484
    %486 = vdwg.mxu0
    %v487 = vadd.f32 %v137, %v485
    %v488 = vtanh.pop %v487
    %v489 = vmul.f32 %v488, %v165
    %v490 = vadd.f32 %v489, %v167
    %v491 = vmul.f32 %v490, %v455
    %493 = vrot.lane.b32.xlu0 %v490, 64
    %v494 = vpop.permute.xlu0 %493
    %v496 = vmul.f32 %v490, %v494
    %498 = vrot.lane.b32.xlu0 %v496, 32
    %v499 = vpop.permute.xlu0 %498
    %v501 = vadd.f32 %v491, %v499
    %v502 = vtanh.pop %v501
    %504 = vrot.lane.b32.xlu0 %v502, 64
    %v505 = vpop.permute.xlu0 %504
    %v507 = vmul.f32 %v490, %v505
    %v508 = vmax.f32 %v507, 0.0
    %v509 = vperm.slane %v44, 0
    %511 = vrot.lane.b32.xlu0 %v508, 32
    %v512 = vpop.permute.xlu0 %511
    %v513 = vsel %vm139, %v512, 0
    %515 = vmatpush.msra.mxu0 0.0
    %516 = vmatpush.msra.mxu0 0.0
    %517 = vmatpush.msra.mxu0 0.0
    %518 = vmatpush.msra.mxu0 0.0
    %519 = vmatpush.msra.mxu0 0.0
    %520 = vmatpush.msra.mxu0 0.0
    %521 = vmatpush.msra.mxu0 0.0
    %522 = vmatpush.msra.mxu0 0.0
    %523 = vmatpush.msra.mxu0 0.0
    %524 = vmatpush.msra.mxu0 0.0
    %525 = vmatpush.msra.mxu0 0.0
    %526 = vmatpush.msra.mxu0 0.0
    %527 = vmatpush.msra.mxu0 %v43
    %528 = vmatpush.msra.mxu0 %v42
    %529 = vmatpush.msra.mxu0 %v41
    %530 = vmatpush.msra.mxu0 %v40
    %531 = vmatmul.f32.gmra.mxu0 %v513
    %v532 = vpop.f32.mrf.mxu0
    %v533 = vadd.f32 %v509, %v532
    %534 = vdwg.mxu0
    %v535 = vmax.f32 %v533, 0.0
    %v536 = vperm.slane %v61, 0
    %537 = vmatpush.msra.mxu0 %v60
    %538 = vmatpush.msra.mxu0 %v59
    %539 = vmatpush.msra.mxu0 %v58
    %540 = vmatpush.msra.mxu0 %v57
    %541 = vmatpush.msra.mxu0 %v56
    %542 = vmatpush.msra.mxu0 %v55
    %543 = vmatpush.msra.mxu0 %v54
    %544 = vmatpush.msra.mxu0 %v53
    %545 = vmatpush.msra.mxu0 %v52
    %546 = vmatpush.msra.mxu0 %v51
    %547 = vmatpush.msra.mxu0 %v50
    %548 = vmatpush.msra.mxu0 %v49
    %549 = vmatpush.msra.mxu0 %v48
    %550 = vmatpush.msra.mxu0 %v47
    %551 = vmatpush.msra.mxu0 %v46
    %552 = vmatpush.msra.mxu0 %v45
    %553 = vmatmul.f32.gmra.mxu0 %v535
    %v554 = vpop.f32.mrf.mxu0
    %v555 = vadd.f32 %v536, %v554
    %556 = vdwg.mxu0
    %557 = vst [vmem:[%s2] sm:$0xff] %v555
    // Predicated region
    $region14: #{_lstm_forward_impl.1} parent=1 // pred_check
      _
    $region15: #{_lstm_forward_impl.1} parent=1 // pred_check_branch
      %559 = sbr.rel (0) target = $region17
    $region16: #{_lstm_forward_impl.1} parent=1 // pred_region
      _
    $region17: #{_lstm_forward_impl.1} parent=1 // pred_fallthru
      _
    // Predicated region
    $region18: #{_lstm_forward_impl.1} parent=1 // pred_check
      _
    $region19: #{_lstm_forward_impl.1} parent=1 // pred_check_branch
      %561 = sbr.rel (0) target = $region21
    $region20: #{_lstm_forward_impl.1} parent=1 // pred_region
      _
    $region21: #{_lstm_forward_impl.1} parent=1 // pred_fallthru
      _
    %562 = vsyncpa [#allocation3], 1

</llo_original>
